<compile_context>
chip_gen: v6e
topology: v6e:2x2x1
jax: 0.10.0
libtpu: 0.0.40
codegen_flags: <defaults>
</compile_context>

<pallas_src>
import jax
import jax.numpy as jnp
from jax.experimental import pallas as pl
from jax.experimental.pallas import tpu as pltpu


def _round_up(x, m):
    return ((x + m - 1) // m) * m


def td3_actor_kernel(x_ref, w1_ref, w2_ref, w3_ref, out_ref):
    # x_ref : (TB, in_dim)      f32  -- natural PyTorch layout, transposed here
    # w1_ref: (fc1, in_dim + 1) bf16 -- bias fused as last column
    # w2_ref: (fc2, fc1 + 1)    bf16
    # w3_ref: (8,   fc2 + 1)    bf16 -- rows >= n_actions are zero
    # out   : (8, TB)           f32
    tb = out_ref.shape[1]
    ones = jnp.ones((1, tb), jnp.float32)

    # In-kernel transpose (XLU) puts the batch on the lane axis; concat the
    # ones-row in f32 at an 8-aligned boundary, then downcast MXU operands.
    x_t = x_ref[...].T                                              # (in_dim, TB)
    xa = jnp.concatenate([x_t, ones], axis=0).astype(jnp.bfloat16)  # (in_dim+1, TB)

    # fc1 + relu: bf16 MXU operands, f32 accumulate, f32 elementwise (v5e-safe).
    h1 = jnp.dot(w1_ref[...], xa, preferred_element_type=jnp.float32)
    h1a = jnp.concatenate([jnp.maximum(h1, 0.0), ones],
                          axis=0).astype(jnp.bfloat16)              # (fc1+1, TB)

    # fc2 + relu
    h2 = jnp.dot(w2_ref[...], h1a, preferred_element_type=jnp.float32)
    h2a = jnp.concatenate([jnp.maximum(h2, 0.0), ones],
                          axis=0).astype(jnp.bfloat16)              # (fc2+1, TB)

    # mu + tanh (padded rows have zero weights -> tanh(0)=0, trimmed by wrapper)
    mu = jnp.dot(w3_ref[...], h2a, preferred_element_type=jnp.float32)
    out_ref[...] = jnp.tanh(mu).astype(out_ref.dtype)


def _pick_block_b(batch):
    """Largest 128-multiple batch tile (<= 2048) keeping >= 2 grid steps once
    the batch exceeds one tile (so v7x megacore gets both TensorCores)."""
    if batch <= 256:
        return _round_up(max(batch, 1), 128)
    if batch <= 4096:
        return _round_up(pl.cdiv(batch, 2), 128)
    return 2048


def td3_actor_forward(state, params, block_b=None):
    """state: (B, input_dim) f32.  Returns (B, n_actions) f32."""
    w1a, w2a, w3a = params["w1a"], params["w2a"], params["w3a"]
    n_act = params["n_actions"]
    n_act_pad = w3a.shape[0]
    B, in_dim = state.shape
    assert w1a.shape[1] == in_dim + 1

    if block_b is None:
        block_b = _pick_block_b(B)
    b_pad = _round_up(B, block_b)

    x = state
    if b_pad != B:
        # Keep an explicit pad: no ragged trailing blocks.  Padded columns
        # compute tanh/relu of the bias and are discarded below.
        x = jnp.pad(x, ((0, b_pad - B), (0, 0)))

    grid = (b_pad // block_b,)

    def resident(arr):
        # Same block index every grid step -> DMA'd once, stays resident.
        return pl.BlockSpec(arr.shape, lambda i: (0, 0))

    out_t = pl.pallas_call(
        td3_actor_kernel,
        out_shape=jax.ShapeDtypeStruct((n_act_pad, b_pad), jnp.float32),
        grid=grid,
        in_specs=[
            pl.BlockSpec((block_b, in_dim), lambda i: (i, 0)),   # state tile
            resident(w1a), resident(w2a), resident(w3a),
        ],
        out_specs=pl.BlockSpec((n_act_pad, block_b), lambda i: (0, i)),
        compiler_params=pltpu.CompilerParams(
            dimension_semantics=("parallel",)),
    )(x, w1a, w2a, w3a)

    return out_t[:n_act, :B].T                                   # (B, n_actions)


def init_params(key, input_dim, fc1_dims, fc2_dims, n_actions):
    """nn.Linear-style U(-1/sqrt(fan_in), 1/sqrt(fan_in)) init.

    Weights are stored (out, in+1) in bf16 with the bias fused as the last
    column; the mu layer is additionally row-padded to 8 (zero rows)."""
    ks = jax.random.split(key, 6)

    def linear(kw, kb, fan_in, fan_out):
        bound = 1.0 / (fan_in ** 0.5)
        w = jax.random.uniform(kw, (fan_out, fan_in), jnp.float32, -bound, bound)
        b = jax.random.uniform(kb, (fan_out,), jnp.float32, -bound, bound)
        return w, b

    w1, b1 = linear(ks[0], ks[1], input_dim, fc1_dims)
    w2, b2 = linear(ks[2], ks[3], fc1_dims, fc2_dims)
    w3, b3 = linear(ks[4], ks[5], fc2_dims, n_actions)

    def fuse(w, b):
        return jnp.concatenate([w, b[:, None]], axis=1)

    w1a = fuse(w1, b1).astype(jnp.bfloat16)
    w2a = fuse(w2, b2).astype(jnp.bfloat16)
    n_act_pad = _round_up(n_actions, 8)
    w3a = jnp.pad(fuse(w3, b3),
                  ((0, n_act_pad - n_actions), (0, 0))).astype(jnp.bfloat16)

    return dict(w1a=w1a, w2a=w2a, w3a=w3a, n_actions=n_actions)


def reference_forward(state, params):
    # Pure-JAX f32 reference using the same bf16-stored (rounded) weights;
    # only the in-kernel bf16 activation rounding differs.
    def split(wa):
        wa = wa.astype(jnp.float32)
        return wa[:, :-1], wa[:, -1]

    w1, b1 = split(params["w1a"])
    w2, b2 = split(params["w2a"])
    w3, b3 = split(params["w3a"][:params["n_actions"]])
    h1 = jnp.maximum(state @ w1.T + b1, 0.0)
    h2 = jnp.maximum(h1 @ w2.T + b2, 0.0)
    return jnp.tanh(h2 @ w3.T + b3)


if __name__ == "__main__":
    # Shapes consistent with the module: input_dims=(8,), fc1=32, fc2=32,
    # n_actions=4, batch=2.
    B, IN_DIM, FC1, FC2, N_ACT = 2, 8, 32, 32, 4

    key = jax.random.PRNGKey(0)
    k_state, k_params, k_big = jax.random.split(key, 3)
    params = init_params(k_params, IN_DIM, FC1, FC2, N_ACT)

    # Tiny batch: single 128-wide tile, single grid step.
    state = jax.random.normal(k_state, (B, IN_DIM), dtype=jnp.float32)
    out = jax.block_until_ready(td3_actor_forward(state, params))
    ref = reference_forward(state, params)
    assert out.shape == (B, N_ACT)
    assert jnp.allclose(out, ref, atol=2e-2, rtol=2e-2), \
        float(jnp.max(jnp.abs(out - ref)))

    # Larger batch: exercises the large-tile, 2-step (megacore-shardable),
    # resident-weight path with explicit batch padding.
    B2 = 1000
    state2 = jax.random.normal(k_big, (B2, IN_DIM), dtype=jnp.float32)
    out2 = jax.block_until_ready(td3_actor_forward(state2, params))
    ref2 = reference_forward(state2, params)
    assert out2.shape == (B2, N_ACT)
    assert jnp.allclose(out2, ref2, atol=2e-2, rtol=2e-2), \
        float(jnp.max(jnp.abs(out2 - ref2)))

    # TODO(synk): the Adam optimizer step and checkpoint save/load of the
    # PyTorch module are training/IO concerns outside the forward pass and are
    # intentionally not implemented in Pallas.
    print("KERNEL_OK")
</pallas_src>

<mosaic_0001>
module attributes {stable_mosaic.version = 11 : i64} {
  func.func @td3_actor_kernel(%arg0: i32, %arg1: memref<128x8xf32, #tpu.memory_space<vmem>>, %arg2: memref<32x9xbf16, #tpu.memory_space<vmem>>, %arg3: memref<32x33xbf16, #tpu.memory_space<vmem>>, %arg4: memref<8x33xbf16, #tpu.memory_space<vmem>>, %arg5: memref<8x128xf32, #tpu.memory_space<vmem>>) attributes {dimension_semantics = [#tpu.dimension_semantics<parallel>], iteration_bounds = array<i64: 1>, scalar_prefetch = 0 : i64, scratch_operands = 0 : i64, tpu.core_type = #tpu.core_type<tc>, window_params = [{transform_indices = @transform_0, window_bounds = array<i64: 128, 8>}, {pipeline_mode = #tpu.pipeline_mode<synchronous>, transform_indices = @transform_1, window_bounds = array<i64: 32, 9>}, {pipeline_mode = #tpu.pipeline_mode<synchronous>, transform_indices = @transform_2, window_bounds = array<i64: 32, 33>}, {pipeline_mode = #tpu.pipeline_mode<synchronous>, transform_indices = @transform_3, window_bounds = array<i64: 8, 33>}, {transform_indices = @transform_4, window_bounds = array<i64: 8, 128>}]} {
    %cst = arith.constant 1.000000e+00 : f32
    %0 = vector.broadcast %cst : f32 to vector<1x128xf32>
    %c0 = arith.constant 0 : index
    %c0_0 = arith.constant 0 : index
    %1 = vector.load %arg1[%c0, %c0_0] : memref<128x8xf32, #tpu.memory_space<vmem>>, vector<128x8xf32>
    %2 = tpu.transpose %1, [1, 0] : vector<128x8xf32> -> vector<8x128xf32>
    %3 = tpu.concatenate %2, %0 in 0 : vector<8x128xf32>, vector<1x128xf32> -> vector<9x128xf32>
    %4 = arith.truncf %3 : vector<9x128xf32> to vector<9x128xbf16>
    %c0_1 = arith.constant 0 : index
    %c0_2 = arith.constant 0 : index
    %5 = vector.load %arg2[%c0_1, %c0_2] : memref<32x9xbf16, #tpu.memory_space<vmem>>, vector<32x9xbf16>
    %cst_3 = arith.constant dense<0.000000e+00> : vector<32x128xf32>
    %6 = tpu.matmul %5, %4, %cst_3 {dimension_numbers = #tpu.dot_dimension_numbers<[1], [0], [0], [1], [0, 0, 1, 1], [], []>} : vector<32x9xbf16>, vector<9x128xbf16>, vector<32x128xf32> -> vector<32x128xf32>
    %cst_4 = arith.constant 0.000000e+00 : f32
    %7 = vector.broadcast %cst_4 : f32 to vector<32x128xf32>
    %8 = arith.maximumf %6, %7 : vector<32x128xf32>
    %9 = tpu.concatenate %8, %0 in 0 : vector<32x128xf32>, vector<1x128xf32> -> vector<33x128xf32>
    %10 = arith.truncf %9 : vector<33x128xf32> to vector<33x128xbf16>
    %c0_5 = arith.constant 0 : index
    %c0_6 = arith.constant 0 : index
    %11 = vector.load %arg3[%c0_5, %c0_6] : memref<32x33xbf16, #tpu.memory_space<vmem>>, vector<32x33xbf16>
    %cst_7 = arith.constant dense<0.000000e+00> : vector<32x128xf32>
    %12 = tpu.matmul %11, %10, %cst_7 {dimension_numbers = #tpu.dot_dimension_numbers<[1], [0], [0], [1], [0, 0, 1, 1], [], []>} : vector<32x33xbf16>, vector<33x128xbf16>, vector<32x128xf32> -> vector<32x128xf32>
    %cst_8 = arith.constant 0.000000e+00 : f32
    %13 = vector.broadcast %cst_8 : f32 to vector<32x128xf32>
    %14 = arith.maximumf %12, %13 : vector<32x128xf32>
    %15 = tpu.concatenate %14, %0 in 0 : vector<32x128xf32>, vector<1x128xf32> -> vector<33x128xf32>
    %16 = arith.truncf %15 : vector<33x128xf32> to vector<33x128xbf16>
    %c0_9 = arith.constant 0 : index
    %c0_10 = arith.constant 0 : index
    %17 = vector.load %arg4[%c0_9, %c0_10] : memref<8x33xbf16, #tpu.memory_space<vmem>>, vector<8x33xbf16>
    %cst_11 = arith.constant dense<0.000000e+00> : vector<8x128xf32>
    %18 = tpu.matmul %17, %16, %cst_11 {dimension_numbers = #tpu.dot_dimension_numbers<[1], [0], [0], [1], [0, 0, 1, 1], [], []>} : vector<8x33xbf16>, vector<33x128xbf16>, vector<8x128xf32> -> vector<8x128xf32>
    %19 = math.tanh %18 : vector<8x128xf32>
    %c0_12 = arith.constant 0 : index
    %c0_13 = arith.constant 0 : index
    %20 = vector.load %arg5[%c0_12, %c0_13] : memref<8x128xf32, #tpu.memory_space<vmem>>, vector<8x128xf32>
    tpu.vector_store %arg5[%c0_12, %c0_13], %19 {strides = array<i32>} : memref<8x128xf32, #tpu.memory_space<vmem>>, vector<8x128xf32>,
    return
  }
  func.func @transform_0(%arg0: i32) -> (i32, i32) {
    %c0_i32 = arith.constant 0 : i32
    %c0_i32_0 = arith.constant 0 : i32
    return %arg0, %c0_i32 : i32, i32
  }
  func.func @transform_1(%arg0: i32) -> (i32, i32) {
    %c0_i32 = arith.constant 0 : i32
    %c0_i32_0 = arith.constant 0 : i32
    %c0_i32_1 = arith.constant 0 : i32
    return %c0_i32, %c0_i32_0 : i32, i32
  }
  func.func @transform_2(%arg0: i32) -> (i32, i32) {
    %c0_i32 = arith.constant 0 : i32
    %c0_i32_0 = arith.constant 0 : i32
    %c0_i32_1 = arith.constant 0 : i32
    return %c0_i32, %c0_i32_0 : i32, i32
  }
  func.func @transform_3(%arg0: i32) -> (i32, i32) {
    %c0_i32 = arith.constant 0 : i32
    %c0_i32_0 = arith.constant 0 : i32
    %c0_i32_1 = arith.constant 0 : i32
    return %c0_i32, %c0_i32_0 : i32, i32
  }
  func.func @transform_4(%arg0: i32) -> (i32, i32) {
    %c0_i32 = arith.constant 0 : i32
    %c0_i32_0 = arith.constant 0 : i32
    return %c0_i32, %arg0 : i32, i32
  }
}

</mosaic_0001>

<llo_original>
// kernel: tpu_custom_call.1
$region0: #{tpu_custom_call.1}
  #allocation0 [shape = 'u32[]', space=smem, size = 0x4, offset = 0x4, fixed_abs, tag = 'smem constant byte address 0x4 - core index']
  #allocation1 [shape = 'u32[144,128]{1,0:T(1,128)}', space=vmem, size = 0x12000, scoped, tag = 'internal scratch']
  %s0 = inlined_call_operand.vmem [shape: f32[128,8], index: 0, kind: input, shape index: {}]
  %s1 = inlined_call_operand.vmem [shape: bf16[32,9], index: 1, kind: input, shape index: {}]
  %s2 = inlined_call_operand.vmem [shape: bf16[32,33], index: 2, kind: input, shape index: {}]
  %s3 = inlined_call_operand.vmem [shape: bf16[8,33], index: 3, kind: input, shape index: {}]
  %s4 = inlined_call_operand.hbm [shape: f32[8,128], index: 4, kind: output, shape index: {}]
  %s5 = sld [smem:[#allocation0]]
  $region26: #{tpu_custom_call.1} parent=0
    _
  %s7 = ssub.s32 1, %s5
  %s8 = scalar_select 0, %s7, %s5
  $region1: #{tpu_custom_call.1} parent=0
    #allocation2 [shape = 'u8[4096]{0}', space=vmem, size = 0x1000, scoped, tag = 'output window, operand 0, single buffered']
    #allocation3 [shape = 's32[1]{0}', space=sflag, size = 0x4, scoped, tag = 'scoped memory for tpu_custom_call.1']
    %9 = vsyncpa [#allocation3], 0
    // Predicated region
    $region2: #{tpu_custom_call.1} parent=1 // pred_check
      _
    $region3: #{tpu_custom_call.1} parent=1 // pred_check_branch
      %11 = sbr.rel (0) target = $region5
    $region4: #{tpu_custom_call.1} parent=1 // pred_region
      _
    $region5: #{tpu_custom_call.1} parent=1 // pred_fallthru
      _
    // Predicated region
    $region6: #{tpu_custom_call.1} parent=1 // pred_check
      _
    $region7: #{tpu_custom_call.1} parent=1 // pred_check_branch
      %13 = sbr.rel (0) target = $region9
    $region8: #{tpu_custom_call.1} parent=1 // pred_region
      _
    $region9: #{tpu_custom_call.1} parent=1 // pred_fallthru
      _
    // Predicated region
    $region10: #{tpu_custom_call.1} parent=1 // pred_check
      _
    $region11: #{tpu_custom_call.1} parent=1 // pred_check_branch
      %15 = sbr.rel (0) target = $region13
    $region12: #{tpu_custom_call.1} parent=1 // pred_region
      _
    $region13: #{tpu_custom_call.1} parent=1 // pred_fallthru
      _
    // Predicated region
    $region14: #{tpu_custom_call.1} parent=1 // pred_check
      _
    $region15: #{tpu_custom_call.1} parent=1 // pred_check_branch
      %17 = sbr.rel (0) target = $region17
    $region16: #{tpu_custom_call.1} parent=1 // pred_region
      _
    $region17: #{tpu_custom_call.1} parent=1 // pred_fallthru
      _
    %v19 = vld [vmem:[%s0] sm:$0xff]
    %v20 = vld [vmem:[%s0 + $0x8] sm:$0xff]
    %v21 = vld [vmem:[%s0 + $0x10] sm:$0xff]
    %v22 = vld [vmem:[%s0 + $0x18] sm:$0xff]
    %v23 = vld [vmem:[%s0 + $0x20] sm:$0xff]
    %v24 = vld [vmem:[%s0 + $0x28] sm:$0xff]
    %v25 = vld [vmem:[%s0 + $0x30] sm:$0xff]
    %v26 = vld [vmem:[%s0 + $0x38] sm:$0xff]
    %v27 = vld [vmem:[%s0 + $0x40] sm:$0xff]
    %v28 = vld [vmem:[%s0 + $0x48] sm:$0xff]
    %v29 = vld [vmem:[%s0 + $0x50] sm:$0xff]
    %v30 = vld [vmem:[%s0 + $0x58] sm:$0xff]
    %v31 = vld [vmem:[%s0 + $0x60] sm:$0xff]
    %v32 = vld [vmem:[%s0 + $0x68] sm:$0xff]
    %v33 = vld [vmem:[%s0 + $0x70] sm:$0xff]
    %v34 = vld [vmem:[%s0 + $0x78] sm:$0xff]
    %35 = vxpose.xlu0.b32.start [1/16] %v19, 128
    %36 = vxpose.xlu0.b32.cont [2/16] %v20, 128
    %37 = vxpose.xlu0.b32.cont [3/16] %v21, 128
    %38 = vxpose.xlu0.b32.cont [4/16] %v22, 128
    %39 = vxpose.xlu0.b32.cont [5/16] %v23, 128
    %40 = vxpose.xlu0.b32.cont [6/16] %v24, 128
    %41 = vxpose.xlu0.b32.cont [7/16] %v25, 128
    %42 = vxpose.xlu0.b32.cont [8/16] %v26, 128
    %43 = vxpose.xlu0.b32.cont [9/16] %v27, 128
    %44 = vxpose.xlu0.b32.cont [10/16] %v28, 128
    %45 = vxpose.xlu0.b32.cont [11/16] %v29, 128
    %46 = vxpose.xlu0.b32.cont [12/16] %v30, 128
    %47 = vxpose.xlu0.b32.cont [13/16] %v31, 128
    %48 = vxpose.xlu0.b32.cont [14/16] %v32, 128
    %49 = vxpose.xlu0.b32.cont [15/16] %v33, 128
    %50 = vxpose.xlu0.b32.end [16/16] %v34, 128
    %v51 = vpop.trf.xlu0
    %v52 = vpop.trf.xlu0
    %v53 = vpop.trf.xlu0
    %v54 = vpop.trf.xlu0
    %v55 = vpop.trf.xlu0
    %v56 = vpop.trf.xlu0
    %v57 = vpop.trf.xlu0
    %v58 = vpop.trf.xlu0
    %v59 = vpop.trf.xlu0
    %v60 = vpop.trf.xlu0
    %v61 = vpop.trf.xlu0
    %v62 = vpop.trf.xlu0
    %v63 = vpop.trf.xlu0
    %v64 = vpop.trf.xlu0
    %v65 = vpop.trf.xlu0
    %v66 = vpop.trf.xlu0
    %v67 = vpack.c.bf16 1.0, %v51
    %v68 = vld [vmem:[%s1] sm:$0xf]
    %v69 = vld [vmem:[%s1 + $0x4] sm:$0xf]
    %v70 = vld [vmem:[%s1 + $0x8] sm:$0xf]
    %v71 = vld [vmem:[%s1 + $0xc] sm:$0xf]
    %v76 = vunpack.c.l.b16 %v68
    %v77 = vunpack.c.l.b16 %v69
    %v78 = vunpack.c.l.b16 %v70
    %v79 = vunpack.c.l.b16 %v71
    %v80 = vpack.c.b16 %v77, %v76
    %v81 = vpack.c.b16 %v79, %v78
    %vm82 = vcmask 72704
    %v84 = vsel %vm82, %v80, 0
    %v87 = vsel %vm82, %v81, 0
    %vm89 = vcmask 1043456
    %vm90 = vcmask 1044480
    %v91 = vsel %vm89, 4294967295, 65535
    %v92 = vsel %vm90, %v91, 0
    %v94 = vand.u32 %v67, %v92
    %96 = vmatprep.subr.bf16.mxu0 0
    %97 = vmatpush1.bf16.msra.mxu0 0
    %98 = vmatprep.subr.bf16.mxu0 0
    %99 = vmatpush1.bf16.msra.mxu0 0
    %100 = vmatprep.subr.bf16.mxu0 0
    %101 = vmatpush1.bf16.msra.mxu0 0
    %102 = vmatprep.subr.bf16.mxu0 0
    %103 = vmatpush1.bf16.msra.mxu0 0
    %104 = vmatprep.subr.bf16.mxu0 0
    %105 = vmatpush1.bf16.msra.mxu0 0
    %106 = vmatprep.subr.bf16.mxu0 0
    %107 = vmatpush1.bf16.msra.mxu0 0
    %108 = vmatprep.subr.bf16.mxu0 0
    %109 = vmatpush1.bf16.msra.mxu0 0
    %110 = vmatprep.subr.bf16.mxu0 0
    %111 = vmatpush1.bf16.msra.mxu0 %v94
    %112 = vmatprep.subr.bf16.mxu0 0
    %113 = vmatpush2.bf16.msra.mxu0 0
    %114 = vmatprep.subr.bf16.mxu0 0
    %115 = vmatpush2.bf16.msra.mxu0 0
    %116 = vmatprep.subr.bf16.mxu0 0
    %117 = vmatpush2.bf16.msra.mxu0 0
    %118 = vmatprep.subr.bf16.mxu0 0
    %119 = vmatpush2.bf16.msra.mxu0 0
    %120 = vmatprep.subr.bf16.mxu0 0
    %121 = vmatpush2.bf16.msra.mxu0 0
    %122 = vmatprep.subr.bf16.mxu0 0
    %123 = vmatpush2.bf16.msra.mxu0 0
    %124 = vmatprep.subr.bf16.mxu0 0
    %125 = vmatpush2.bf16.msra.mxu0 0
    %126 = vmatprep.subr.bf16.mxu0 0
    %127 = vmatpush2.bf16.msra.mxu0 0
    %128 = vmatprep.mubr.bf16.mxu0 0
    %129 = vmatmul.mubr.bf16.gmra.mxu0 %v84
    %v130 = vpop.f32.mrf.mxu0
    %v131 = vadd.f32 0.0, %v130
    %v132 = vpop.f32.mrf.mxu0
    %v133 = vpop.f32.mrf.mxu0
    %v134 = vadd.f32 0.0, %v133
    %v135 = vpop.f32.mrf.mxu0
    %136 = vmatprep.mubr.bf16.mxu0 0
    %137 = vmatmul.mubr.bf16.gmra.mxu0 %v87
    %v138 = vpop.f32.mrf.mxu0
    %v139 = vadd.f32 0.0, %v138
    %v140 = vpop.f32.mrf.mxu0
    %v141 = vpop.f32.mrf.mxu0
    %v142 = vadd.f32 0.0, %v141
    %v143 = vpop.f32.mrf.mxu0
    %144 = vdwg.mxu0
    %v145 = vmax.f32 %v131, 0.0
    %v146 = vmax.f32 %v134, 0.0
    %v147 = vmax.f32 %v139, 0.0
    %v148 = vmax.f32 %v142, 0.0
    %v149 = vpack.c.bf16 %v146, %v145
    %v150 = vpack.c.bf16 %v148, %v147
    %v151 = vpack.c.bf16 1.0, 1.0
    %v152 = vld [vmem:[%s2] sm:$0xf]
    %v153 = vld [vmem:[%s2 + $0x4] sm:$0xf]
    %v154 = vld [vmem:[%s2 + $0x8] sm:$0xf]
    %v155 = vld [vmem:[%s2 + $0xc] sm:$0xf]
    %v160 = vunpack.c.l.b16 %v152
    %v161 = vunpack.c.l.b16 %v153
    %v162 = vunpack.c.l.b16 %v154
    %v163 = vunpack.c.l.b16 %v155
    %v164 = vpack.c.b16 %v161, %v160
    %v165 = vpack.c.b16 %v163, %v162
    %vm166 = vcmask 269312
    %v168 = vsel %vm166, %v164, 0
    %v171 = vsel %vm166, %v165, 0
    %vm173 = vcmask 1040384
    %v174 = vsel 0, 4294967295, 65535
    %v175 = vsel %vm173, %v174, 0
    %v177 = vand.u32 %v151, %v175
    %179 = vmatprep.subr.bf16.mxu0 0
    %180 = vmatpush1.bf16.msra.mxu0 0
    %181 = vmatprep.subr.bf16.mxu0 0
    %182 = vmatpush1.bf16.msra.mxu0 0
    %183 = vmatprep.subr.bf16.mxu0 0
    %184 = vmatpush1.bf16.msra.mxu0 0
    %185 = vmatprep.subr.bf16.mxu0 0
    %186 = vmatpush1.bf16.msra.mxu0 0
    %187 = vmatprep.subr.bf16.mxu0 0
    %188 = vmatpush1.bf16.msra.mxu0 0
    %189 = vmatprep.subr.bf16.mxu0 0
    %190 = vmatpush1.bf16.msra.mxu0 %v177
    %191 = vmatprep.subr.bf16.mxu0 0
    %192 = vmatpush1.bf16.msra.mxu0 %v150
    %193 = vmatprep.subr.bf16.mxu0 0
    %194 = vmatpush1.bf16.msra.mxu0 %v149
    %195 = vmatprep.subr.bf16.mxu0 0
    %196 = vmatpush2.bf16.msra.mxu0 0
    %197 = vmatprep.subr.bf16.mxu0 0
    %198 = vmatpush2.bf16.msra.mxu0 0
    %199 = vmatprep.subr.bf16.mxu0 0
    %200 = vmatpush2.bf16.msra.mxu0 0
    %201 = vmatprep.subr.bf16.mxu0 0
    %202 = vmatpush2.bf16.msra.mxu0 0
    %203 = vmatprep.subr.bf16.mxu0 0
    %204 = vmatpush2.bf16.msra.mxu0 0
    %205 = vmatprep.subr.bf16.mxu0 0
    %206 = vmatpush2.bf16.msra.mxu0 0
    %207 = vmatprep.subr.bf16.mxu0 0
    %208 = vmatpush2.bf16.msra.mxu0 0
    %209 = vmatprep.subr.bf16.mxu0 0
    %210 = vmatpush2.bf16.msra.mxu0 0
    %211 = vmatprep.mubr.bf16.mxu0 0
    %212 = vmatmul.mubr.bf16.gmra.mxu0 %v168
    %v213 = vpop.f32.mrf.mxu0
    %v214 = vadd.f32 0.0, %v213
    %v215 = vpop.f32.mrf.mxu0
    %v216 = vpop.f32.mrf.mxu0
    %v217 = vadd.f32 0.0, %v216
    %v218 = vpop.f32.mrf.mxu0
    %219 = vmatprep.mubr.bf16.mxu0 0
    %220 = vmatmul.mubr.bf16.gmra.mxu0 %v171
    %v221 = vpop.f32.mrf.mxu0
    %v222 = vadd.f32 0.0, %v221
    %v223 = vpop.f32.mrf.mxu0
    %v224 = vpop.f32.mrf.mxu0
    %v225 = vadd.f32 0.0, %v224
    %v226 = vpop.f32.mrf.mxu0
    %227 = vdwg.mxu0
    %v228 = vmax.f32 %v214, 0.0
    %v229 = vmax.f32 %v217, 0.0
    %v230 = vmax.f32 %v222, 0.0
    %v231 = vmax.f32 %v225, 0.0
    %v232 = vpack.c.bf16 %v229, %v228
    %v233 = vpack.c.bf16 %v231, %v230
    %v234 = vld [vmem:[%s3] sm:$0xf]
    %v236 = vsel %vm166, %v234, 0
    %238 = vmatprep.subr.bf16.mxu0 0
    %239 = vmatpush1.bf16.msra.mxu0 0
    %240 = vmatprep.subr.bf16.mxu0 0
    %241 = vmatpush1.bf16.msra.mxu0 0
    %242 = vmatprep.subr.bf16.mxu0 0
    %243 = vmatpush1.bf16.msra.mxu0 0
    %244 = vmatprep.subr.bf16.mxu0 0
    %245 = vmatpush1.bf16.msra.mxu0 0
    %246 = vmatprep.subr.bf16.mxu0 0
    %247 = vmatpush1.bf16.msra.mxu0 0
    %248 = vmatprep.subr.bf16.mxu0 0
    %249 = vmatpush1.bf16.msra.mxu0 %v177
    %250 = vmatprep.subr.bf16.mxu0 0
    %251 = vmatpush1.bf16.msra.mxu0 %v233
    %252 = vmatprep.subr.bf16.mxu0 0
    %253 = vmatpush1.bf16.msra.mxu0 %v232
    %254 = vmatprep.subr.bf16.mxu0 0
    %255 = vmatpush2.bf16.msra.mxu0 0
    %256 = vmatprep.subr.bf16.mxu0 0
    %257 = vmatpush2.bf16.msra.mxu0 0
    %258 = vmatprep.subr.bf16.mxu0 0
    %259 = vmatpush2.bf16.msra.mxu0 0
    %260 = vmatprep.subr.bf16.mxu0 0
    %261 = vmatpush2.bf16.msra.mxu0 0
    %262 = vmatprep.subr.bf16.mxu0 0
    %263 = vmatpush2.bf16.msra.mxu0 0
    %264 = vmatprep.subr.bf16.mxu0 0
    %265 = vmatpush2.bf16.msra.mxu0 0
    %266 = vmatprep.subr.bf16.mxu0 0
    %267 = vmatpush2.bf16.msra.mxu0 0
    %268 = vmatprep.subr.bf16.mxu0 0
    %269 = vmatpush2.bf16.msra.mxu0 0
    %270 = vmatprep.mubr.bf16.mxu0 0
    %271 = vmatmul.mubr.bf16.gmra.mxu0 %v236
    %v272 = vpop.f32.mrf.mxu0
    %v273 = vadd.f32 0.0, %v272
    %v274 = vpop.f32.mrf.mxu0
    %v275 = vpop.f32.mrf.mxu0
    %v276 = vpop.f32.mrf.mxu0
    %277 = vdwg.mxu0
    %v278 = vtanh.pop %v273
    %279 = vst [vmem:[#allocation2] sm:$0xff] %v278
    // Predicated region
    $region18: #{tpu_custom_call.1} parent=1 // pred_check
      _
    $region19: #{tpu_custom_call.1} parent=1 // pred_check_branch
      %281 = sbr.rel (0) target = $region21
    $region20: #{tpu_custom_call.1} parent=1 // pred_region
      %s283 = ssub.s32 128, 128
      %284 = vsyncadd [#allocation3], %s283
      %s286 = sshll.u32 [#allocation2], 4
      %s287 = int_to_ptr.vmem [resolvable:$true] %s286
      %289 = dma.vmem_to_hbm [thread:$0]  %s287, 128, %s4, [#allocation3]
    $region21: #{tpu_custom_call.1} parent=1 // pred_fallthru
      _
    // Predicated region
    $region22: #{tpu_custom_call.1} parent=1 // pred_check
      _
    $region23: #{tpu_custom_call.1} parent=1 // pred_check_branch
      %291 = sbr.rel (0) target = $region25
    $region24: #{tpu_custom_call.1} parent=1 // pred_region
      %292 = dma.done [#allocation3], 128
    $region25: #{tpu_custom_call.1} parent=1 // pred_fallthru
      _
    %293 = vsyncpa [#allocation3], 1

</llo_original>
